<compile_context>
chip_gen: v7x
topology: tpu7x:2x2x1
jax: 0.10.0
libtpu: 0.0.40
codegen_flags: <defaults>
</compile_context>

<pallas_src>
import jax
import jax.numpy as jnp
from jax.experimental import pallas as pl
from jax.experimental.pallas import tpu as pltpu

K = 256      # in_features implied by torch.ones(256)
LANES = 128  # TPU lane width


def _round_up(n, m):
    return ((n + m - 1) // m) * m


def _model_kernel(bias_ref, x_ref, o_ref):
    # bias_ref: SMEM (1,)  f32
    # x_ref:    VMEM (tb, K) f32  (tb % 128 == 0; boundary rows may be garbage)
    # o_ref:    VMEM (tb // 128, 128) f32   lane-dense per-row results
    g = o_ref.shape[0]
    bias = bias_ref[0]
    # Process 128 rows per step so every intermediate is a small (128,128)
    # tile: load -> VPU fold (256 lanes -> 128) -> XLU transpose (rows -> lanes)
    # -> sublane reduce -> elementwise tail -> one-row store.  No cross-row
    # mixing, so garbage rows of a partial boundary tile only pollute their own
    # (discarded) outputs.
    for gi in range(g):
        xg = x_ref[pl.ds(gi * LANES, LANES), :]          # (128, 256)
        h = xg[:, :LANES] + xg[:, LANES:]                # (128, 128)  VPU fold
        ht = jnp.transpose(h)                            # (128, 128)  XLU
        s = jnp.sum(ht, axis=0, keepdims=True)           # (1, 128) row sums, lane-dense
        v1 = s + bias                                    # linear bias
        v2 = jnp.clip(v1, 0.0, 6.0)                      # clamp(min=0, max=6)
        v4 = (v2 + 3.0) * 6.0                            # (+3) * 6
        o_ref[pl.ds(gi, 1), :] = v4.astype(o_ref.dtype)


def model_forward(x, bias1, *, block_rows=4096, min_grid_steps=4, force_pallas=False):
    """x: (B, 256) float32, bias1: (1,) float32 -> (B,) float32."""
    B, k = x.shape
    assert k == K, f"expected last dim {K}, got {k}"
    bias1 = bias1.reshape((1,)).astype(jnp.float32)

    # Tiny batches: a single fused XLA reduce beats the fixed Pallas launch
    # overhead. force_pallas=True bypasses this so the kernel can be tested.
    if B < 512 and not force_pallas:
        return (jnp.clip(jnp.sum(x, axis=-1) + bias1[0], 0.0, 6.0) + 3.0) * 6.0

    # ---- tile selection (no input padding is ever materialized) ----
    # Lane-dense (tb//128, 128) output blocks need tb % 128 == 0 always, and
    # tb % 1024 == 0 whenever the grid has more than one step (the out block's
    # sublane dim must be a multiple of 8).
    block_rows = max(1024, _round_up(block_rows, 1024))
    if B <= 1024:
        tb = _round_up(B, LANES)                       # single tile
    else:
        # Target >= min_grid_steps steps so v7x's two TensorCores both get
        # work and the double-buffered pipeline has iterations to overlap.
        tb = min(block_rows, _round_up(pl.cdiv(B, min_grid_steps), 1024))
    grid = pl.cdiv(B, tb)
    out_rows = grid * (tb // LANES)                    # covers the padded tail

    cost = pl.CostEstimate(
        flops=B * K,                                   # one add per element
        transcendentals=0,
        bytes_accessed=B * K * 4 + B * 4 + 4,
    )

    out = pl.pallas_call(
        _model_kernel,
        out_shape=jax.ShapeDtypeStruct((out_rows, LANES), x.dtype),
        grid=(grid,),
        in_specs=[
            pl.BlockSpec(memory_space=pltpu.SMEM),     # scalar bias
            pl.BlockSpec((tb, K), lambda i: (i, 0)),   # streamed batch tile
        ],
        out_specs=pl.BlockSpec((tb // LANES, LANES), lambda i: (i, 0)),
        compiler_params=pltpu.CompilerParams(
            dimension_semantics=("parallel",),         # v7x: shard over 2 TCs
        ),
        cost_estimate=cost,
    )(bias1, x)
    # Flatten the lane-dense blocks back to (B,) and drop padded tail rows.
    return out.reshape(-1)[:B]


if __name__ == "__main__":
    key = jax.random.PRNGKey(0)

    # torch.nn.Parameter(torch.Tensor(1)) is uninitialized in the reference;
    # use a fixed deterministic value. bias2 exists but is unused in forward.
    bias1 = jnp.array([0.5], dtype=jnp.float32)

    def ref_fn(x):
        return (jnp.clip(jnp.sum(x, axis=-1) + bias1[0], 0.0, 6.0) + 3.0) * 6.0

    k1, k2, k3 = jax.random.split(key, 3)

    # 1) Tiny batch, forced through the Pallas path (single partial tile).
    x1 = jax.random.normal(k1, (8, K), dtype=jnp.float32)
    y1 = jax.block_until_ready(model_forward(x1, bias1, force_pallas=True))
    assert y1.shape == (8,)
    assert jnp.allclose(y1, ref_fn(x1), atol=1e-4, rtol=1e-5)

    # 2) Exactly one full tile (B = 1024).
    x2 = jax.random.normal(k2, (1024, K), dtype=jnp.float32)
    y2 = jax.block_until_ready(model_forward(x2, bias1, force_pallas=True))
    assert y2.shape == (1024,)
    assert jnp.allclose(y2, ref_fn(x2), atol=1e-4, rtol=1e-5)

    # 3) Multi-tile with a partial boundary tile (B=2050 -> tb=1024, grid=(3,)):
    #    exercises the pad-free boundary handling and the pipelined grid.
    x3 = jax.random.normal(k3, (2050, K), dtype=jnp.float32)
    y3 = jax.block_until_ready(model_forward(x3, bias1))
    assert y3.shape == (2050,)
    assert jnp.allclose(y3, ref_fn(x3), atol=1e-4, rtol=1e-5)

    print("KERNEL_OK")
</pallas_src>

<mosaic_0001>
module attributes {stable_mosaic.version = 11 : i64} {
  func.func @_model_kernel(%arg0: i32, %arg1: memref<1xf32, #tpu.memory_space<smem>>, %arg2: memref<128x256xf32, #tpu.memory_space<vmem>>, %arg3: memref<1x128xf32, #tpu.memory_space<vmem>>) attributes {dimension_semantics = [#tpu.dimension_semantics<parallel>], iteration_bounds = array<i64: 1>, scalar_prefetch = 0 : i64, scratch_operands = 0 : i64, tpu.core_type = #tpu.core_type<tc>, window_params = [{transform_indices = @transform_0, window_bounds = array<i64: 1>}, {transform_indices = @transform_1, window_bounds = array<i64: 128, 256>}, {transform_indices = @transform_2, window_bounds = array<i64: 1, 128>}]} {
    %c0 = arith.constant 0 : index
    %0 = memref.load %arg1[%c0] : memref<1xf32, #tpu.memory_space<smem>>
    %c0_0 = arith.constant 0 : index
    %c0_1 = arith.constant 0 : index
    %1 = vector.load %arg2[%c0_0, %c0_1] : memref<128x256xf32, #tpu.memory_space<vmem>>, vector<128x256xf32>
    %2 = vector.extract_strided_slice %1 {offsets = [0, 0], sizes = [128, 128], strides = [1, 1]} : vector<128x256xf32> to vector<128x128xf32>
    %3 = vector.extract_strided_slice %1 {offsets = [0, 128], sizes = [128, 128], strides = [1, 1]} : vector<128x256xf32> to vector<128x128xf32>
    %4 = arith.addf %2, %3 : vector<128x128xf32>
    %5 = tpu.transpose %4, [1, 0] : vector<128x128xf32> -> vector<128x128xf32>
    %cst = arith.constant dense<0.000000e+00> : vector<128xf32>
    %6 = vector.multi_reduction <add>, %5, %cst [0] : vector<128x128xf32> to vector<128xf32>
    %7 = vector.shape_cast %6 : vector<128xf32> to vector<1x128xf32>
    %8 = vector.broadcast %0 : f32 to vector<1x128xf32>
    %9 = arith.addf %7, %8 : vector<1x128xf32>
    %cst_2 = arith.constant 0.000000e+00 : f32
    %cst_3 = arith.constant 6.000000e+00 : f32
    %10 = vector.broadcast %cst_2 : f32 to vector<1x128xf32>
    %11 = arith.maximumf %10, %9 : vector<1x128xf32>
    %12 = vector.broadcast %cst_3 : f32 to vector<1x128xf32>
    %13 = arith.minimumf %12, %11 : vector<1x128xf32>
    %cst_4 = arith.constant 3.000000e+00 : f32
    %14 = vector.broadcast %cst_4 : f32 to vector<1x128xf32>
    %15 = arith.addf %13, %14 : vector<1x128xf32>
    %cst_5 = arith.constant 6.000000e+00 : f32
    %16 = vector.broadcast %cst_5 : f32 to vector<1x128xf32>
    %17 = arith.mulf %15, %16 : vector<1x128xf32>
    %c0_6 = arith.constant 0 : index
    %c0_7 = arith.constant 0 : index
    %18 = vector.load %arg3[%c0_6, %c0_7] : memref<1x128xf32, #tpu.memory_space<vmem>>, vector<1x128xf32>
    tpu.vector_store %arg3[%c0_6, %c0_7], %17 {strides = array<i32>} : memref<1x128xf32, #tpu.memory_space<vmem>>, vector<1x128xf32>,
    return
  }
  func.func @transform_0(%arg0: i32) -> i32 {
    %c0_i32 = arith.constant 0 : i32
    %c0_i32_0 = arith.constant 0 : i32
    return %c0_i32 : i32
  }
  func.func @transform_1(%arg0: i32) -> (i32, i32) {
    %c0_i32 = arith.constant 0 : i32
    %c0_i32_0 = arith.constant 0 : i32
    return %arg0, %c0_i32 : i32, i32
  }
  func.func @transform_2(%arg0: i32) -> (i32, i32) {
    %c0_i32 = arith.constant 0 : i32
    %c0_i32_0 = arith.constant 0 : i32
    return %arg0, %c0_i32 : i32, i32
  }
}

</mosaic_0001>

<llo_original>
// kernel: tpu_custom_call.1
$region0: #{tpu_custom_call.1}
  #allocation0 [shape = 'u32[]', space=smem, size = 0x4, offset = 0x4, fixed_abs, tag = 'smem constant byte address 0x4 - core index']
  #allocation1 [shape = 'u32[144,128]{1,0:T(1,128)}', space=vmem, size = 0x12000, scoped, tag = 'internal scratch']
  #allocation2 [shape = 'f32[1]{0:T(128)S(6)}', space=smem, size = 0x200, scoped, tag = 'scoped memory for tpu_custom_call.1']
  %s0 = inlined_call_operand.<no memory space> [shape: f32[1], index: 0, kind: input, shape index: {}]
  %s1 = inlined_call_operand.hbm [shape: f32[8,256], index: 1, kind: input, shape index: {}]
  %s2 = inlined_call_operand.hbm [shape: f32[1,128], index: 2, kind: output, shape index: {}]
  %s3 = sld [smem:[#allocation0]]
  $region22: #{tpu_custom_call.1} parent=0
    _
  %s5 = ssub.s32 1, %s3
  %s6 = scalar_select 0, %s5, %s3
  %7 = sst [smem:[#allocation2]] %s0
  $region1: #{tpu_custom_call.1} parent=0
    #allocation3 [shape = 'u8[131072]{0}', space=vmem, size = 0x20000, scoped, tag = 'input window, operand 1, single buffered']
    #allocation4 [shape = 's32[1]{0}', space=sflag, size = 0x4, scoped, tag = 'scoped memory for tpu_custom_call.1']
    #allocation5 [shape = 's32[1]{0}', space=sflag, size = 0x4, scoped, tag = 'scoped memory for tpu_custom_call.1']
    #allocation6 [shape = 'u8[512]{0}', space=vmem, size = 0x400, scoped, tag = 'output window, operand 0, single buffered']
    %8 = vsyncpa [#allocation4], 0
    %9 = vsyncpa [#allocation5], 0
    // Predicated region
    $region2: #{tpu_custom_call.1} parent=1 // pred_check
      _
    $region3: #{tpu_custom_call.1} parent=1 // pred_check_branch
      %11 = sbr.rel (0) target = $region5
    $region4: #{tpu_custom_call.1} parent=1 // pred_region
      _
    $region5: #{tpu_custom_call.1} parent=1 // pred_fallthru
      _
    // Predicated region
    $region6: #{tpu_custom_call.1} parent=1 // pred_check
      _
    $region7: #{tpu_custom_call.1} parent=1 // pred_check_branch
      %13 = sbr.rel (0) target = $region9
    $region8: #{tpu_custom_call.1} parent=1 // pred_region
      %s15 = ssub.s32 4096, 256
      %16 = vsyncadd [#allocation4], %s15
      %s17 = sshll.u32 [#allocation3], 4
      %s18 = int_to_ptr.vmem [resolvable:$true] %s17
      %23 = dma.hbm_to_vmem [thread:$0]  %s1, 256, %s18, [#allocation4], 256, 256, 16
    $region9: #{tpu_custom_call.1} parent=1 // pred_fallthru
      _
    // Predicated region
    $region10: #{tpu_custom_call.1} parent=1 // pred_check
      _
    $region11: #{tpu_custom_call.1} parent=1 // pred_check_branch
      %25 = sbr.rel (0) target = $region13
    $region12: #{tpu_custom_call.1} parent=1 // pred_region
      %26 = dma.done [#allocation4], 4096
    $region13: #{tpu_custom_call.1} parent=1 // pred_fallthru
      _
    %s27 = sld [smem:[#allocation2]]
    %v28 = vld [vmem:[#allocation3] sm:$0xff]
    %v29 = vld [vmem:[#allocation3 + $0x8] sm:$0xff]
    %v30 = vld [vmem:[#allocation3 + $0x10] sm:$0xff]
    %v31 = vld [vmem:[#allocation3 + $0x18] sm:$0xff]
    %v32 = vld [vmem:[#allocation3 + $0x20] sm:$0xff]
    %v33 = vld [vmem:[#allocation3 + $0x28] sm:$0xff]
    %v34 = vld [vmem:[#allocation3 + $0x30] sm:$0xff]
    %v35 = vld [vmem:[#allocation3 + $0x38] sm:$0xff]
    %v36 = vld [vmem:[#allocation3 + $0x40] sm:$0xff]
    %v37 = vld [vmem:[#allocation3 + $0x48] sm:$0xff]
    %v38 = vld [vmem:[#allocation3 + $0x50] sm:$0xff]
    %v39 = vld [vmem:[#allocation3 + $0x58] sm:$0xff]
    %v40 = vld [vmem:[#allocation3 + $0x60] sm:$0xff]
    %v41 = vld [vmem:[#allocation3 + $0x68] sm:$0xff]
    %v42 = vld [vmem:[#allocation3 + $0x70] sm:$0xff]
    %v43 = vld [vmem:[#allocation3 + $0x78] sm:$0xff]
    %v44 = vld [vmem:[#allocation3 + $0x80] sm:$0xff]
    %v45 = vld [vmem:[#allocation3 + $0x88] sm:$0xff]
    %v46 = vld [vmem:[#allocation3 + $0x90] sm:$0xff]
    %v47 = vld [vmem:[#allocation3 + $0x98] sm:$0xff]
    %v48 = vld [vmem:[#allocation3 + $0xa0] sm:$0xff]
    %v49 = vld [vmem:[#allocation3 + $0xa8] sm:$0xff]
    %v50 = vld [vmem:[#allocation3 + $0xb0] sm:$0xff]
    %v51 = vld [vmem:[#allocation3 + $0xb8] sm:$0xff]
    %v52 = vld [vmem:[#allocation3 + $0xc0] sm:$0xff]
    %v53 = vld [vmem:[#allocation3 + $0xc8] sm:$0xff]
    %v54 = vld [vmem:[#allocation3 + $0xd0] sm:$0xff]
    %v55 = vld [vmem:[#allocation3 + $0xd8] sm:$0xff]
    %v56 = vld [vmem:[#allocation3 + $0xe0] sm:$0xff]
    %v57 = vld [vmem:[#allocation3 + $0xe8] sm:$0xff]
    %v58 = vld [vmem:[#allocation3 + $0xf0] sm:$0xff]
    %v59 = vld [vmem:[#allocation3 + $0xf8] sm:$0xff]
    %v60 = vadd.f32 %v28, %v29
    %v61 = vadd.f32 %v30, %v31
    %v62 = vadd.f32 %v32, %v33
    %v63 = vadd.f32 %v34, %v35
    %v64 = vadd.f32 %v36, %v37
    %v65 = vadd.f32 %v38, %v39
    %v66 = vadd.f32 %v40, %v41
    %v67 = vadd.f32 %v42, %v43
    %v68 = vadd.f32 %v44, %v45
    %v69 = vadd.f32 %v46, %v47
    %v70 = vadd.f32 %v48, %v49
    %v71 = vadd.f32 %v50, %v51
    %v72 = vadd.f32 %v52, %v53
    %v73 = vadd.f32 %v54, %v55
    %v74 = vadd.f32 %v56, %v57
    %v75 = vadd.f32 %v58, %v59
    %76 = vxpose.xlu0.b32.start [1/16] %v60, 128
    %77 = vxpose.xlu0.b32.cont [2/16] %v61, 128
    %78 = vxpose.xlu0.b32.cont [3/16] %v62, 128
    %79 = vxpose.xlu0.b32.cont [4/16] %v63, 128
    %80 = vxpose.xlu0.b32.cont [5/16] %v64, 128
    %81 = vxpose.xlu0.b32.cont [6/16] %v65, 128
    %82 = vxpose.xlu0.b32.cont [7/16] %v66, 128
    %83 = vxpose.xlu0.b32.cont [8/16] %v67, 128
    %84 = vxpose.xlu0.b32.cont [9/16] %v68, 128
    %85 = vxpose.xlu0.b32.cont [10/16] %v69, 128
    %86 = vxpose.xlu0.b32.cont [11/16] %v70, 128
    %87 = vxpose.xlu0.b32.cont [12/16] %v71, 128
    %88 = vxpose.xlu0.b32.cont [13/16] %v72, 128
    %89 = vxpose.xlu0.b32.cont [14/16] %v73, 128
    %90 = vxpose.xlu0.b32.cont [15/16] %v74, 128
    %91 = vxpose.xlu0.b32.end [16/16] %v75, 128
    %v92 = vpop.trf.xlu0
    %v93 = vpop.trf.xlu0
    %v94 = vpop.trf.xlu0
    %v95 = vpop.trf.xlu0
    %v96 = vpop.trf.xlu0
    %v97 = vpop.trf.xlu0
    %v98 = vpop.trf.xlu0
    %v99 = vpop.trf.xlu0
    %v100 = vpop.trf.xlu0
    %v101 = vpop.trf.xlu0
    %v102 = vpop.trf.xlu0
    %v103 = vpop.trf.xlu0
    %v104 = vpop.trf.xlu0
    %v105 = vpop.trf.xlu0
    %v106 = vpop.trf.xlu0
    %v107 = vpop.trf.xlu0
    %v108 = vadd.f32 %v92, %v93
    %v109 = vadd.f32 %v108, %v94
    %v110 = vadd.f32 %v109, %v95
    %v111 = vadd.f32 %v110, %v96
    %v112 = vadd.f32 %v111, %v97
    %v113 = vadd.f32 %v112, %v98
    %v114 = vadd.f32 %v113, %v99
    %v115 = vadd.f32 %v114, %v100
    %v116 = vadd.f32 %v115, %v101
    %v117 = vadd.f32 %v116, %v102
    %v118 = vadd.f32 %v117, %v103
    %v119 = vadd.f32 %v118, %v104
    %v120 = vadd.f32 %v119, %v105
    %v121 = vadd.f32 %v120, %v106
    %v122 = vadd.f32 %v121, %v107
    %v123 = vrot.slane %v122, 4
    %v124 = vadd.f32 %v122, %v123
    %v125 = vrot.slane %v124, 2
    %v126 = vadd.f32 %v124, %v125
    %v127 = vrot.slane %v126, 1
    %v128 = vadd.f32 %v126, %v127
    %v129 = vstv %s27
    %v130 = vadd.f32 %v128, %v129
    %v131 = vmax.f32 %v130, 0.0
    %v132 = vmin.f32 %v131, 6.0
    %v133 = vadd.f32 %v132, 3.0
    %v134 = vmul.f32 %v133, 6.0
    %135 = vst [vmem:[#allocation6] sm:$0x1] %v134
    // Predicated region
    $region14: #{tpu_custom_call.1} parent=1 // pred_check
      _
    $region15: #{tpu_custom_call.1} parent=1 // pred_check_branch
      %137 = sbr.rel (0) target = $region17
    $region16: #{tpu_custom_call.1} parent=1 // pred_region
      %s139 = ssub.s32 16, 16
      %140 = vsyncadd [#allocation5], %s139
      %s142 = sshll.u32 [#allocation6], 4
      %s143 = int_to_ptr.vmem [resolvable:$true] %s142
      %145 = dma.vmem_to_hbm [thread:$0]  %s143, 16, %s2, [#allocation5]
    $region17: #{tpu_custom_call.1} parent=1 // pred_fallthru
      _
    // Predicated region
    $region18: #{tpu_custom_call.1} parent=1 // pred_check
      _
    $region19: #{tpu_custom_call.1} parent=1 // pred_check_branch
      %147 = sbr.rel (0) target = $region21
    $region20: #{tpu_custom_call.1} parent=1 // pred_region
      %148 = dma.done [#allocation5], 16
    $region21: #{tpu_custom_call.1} parent=1 // pred_fallthru
      _
    %149 = vsyncpa [#allocation4], 1
    %150 = vsyncpa [#allocation5], 1

</llo_original>
